<compile_context>
chip_gen: v6e
topology: v6e:2x2x1
jax: 0.10.0
libtpu: 0.0.40
codegen_flags: <defaults>
</compile_context>

<pallas_src>
import math

import jax
import jax.numpy as jnp
from jax import lax
from jax.experimental import pallas as pl
from jax.experimental.pallas import tpu as pltpu


def _self_attention_kernel(x_full_ref, x_q_ref, wq_ref, wkv_ref, bkv_ref,
                           o_ref, k_s, va_s):
    """One (batch, query-tile) grid step.

    x_full_ref : (C, T)      f32   full sequence of this batch (resident across q-tiles)
    x_q_ref    : (C, TQ)     f32   query slice (also the residual input)
    wq_ref     : (DK, C)     bf16  query weights, pre-scaled by 1/sqrt(d_key)
    wkv_ref    : (DK+C+1, C) bf16  stacked [W_k ; gamma*W_v ; zeros-row]
    bkv_ref    : (DK+C+1, 1) f32   stacked [0 ; gamma*b_v ; 1]
    o_ref      : (C, TQ)           gamma * attention_out + x
    k_s        : (DK, T)     bf16  scratch: keys, reused across query tiles
    va_s       : (C+1, T)    bf16  scratch: [gamma*v ; ones], reused across query tiles
    """
    dk = k_s.shape[0]
    c = va_s.shape[0] - 1

    # Project k, gamma*v (and the all-ones denominator row) once per batch.
    @pl.when(pl.program_id(1) == 0)
    def _():
        xb = x_full_ref[...].astype(jnp.bfloat16)                        # (C, T)
        proj = jnp.dot(wkv_ref[...], xb,
                       preferred_element_type=jnp.float32) + bkv_ref[...]
        k_s[...] = proj[:dk, :].astype(jnp.bfloat16)                     # (DK, T)
        va_s[...] = proj[dk:, :].astype(jnp.bfloat16)                    # (C+1, T)

    x_q = x_q_ref[...]                                                   # (C, TQ) f32
    q = jnp.dot(wq_ref[...], x_q.astype(jnp.bfloat16),
                preferred_element_type=jnp.float32)                      # (DK, TQ)

    # energy[j, i] = sum_d k[d, j] * q[d, i]   (1/sqrt(d_key) is folded into W_q)
    s = lax.dot_general(k_s[...], q.astype(jnp.bfloat16),
                        (((0,), (0,)), ((), ())),
                        preferred_element_type=jnp.float32)              # (T, TQ)

    # Numerically stable, unnormalized softmax over keys j (axis 0).
    m = jnp.max(s, axis=0, keepdims=True)                                # (1, TQ)
    p = jnp.exp(s - m)                                                   # (T, TQ), EUP

    # [gamma*v ; ones] @ p: rows 0..C-1 are the unnormalized attention output,
    # row C is the softmax denominator sum_j p[j, i] from the same MXU pass.
    out_aug = jnp.dot(va_s[...], p.astype(jnp.bfloat16),
                      preferred_element_type=jnp.float32)                # (C+1, TQ)
    inv_l = pl.reciprocal(out_aug[c:c + 1, :], approx=True)              # (1, TQ)

    # gamma is already folded into W_v / b_v, so the epilogue is just `+ x`.
    o_ref[...] = (out_aug[:c, :] * inv_l + x_q).astype(o_ref.dtype)


def self_attention_forward(x, w_query, w_key, w_value, b_value, *, gamma, tq=256):
    """x: (B, C, T). w_query/w_key: (d_key, C). w_value: (C, C). b_value: (C,)."""
    # Module's early return. Only taken for a concrete Python scalar; a traced /
    # learned gamma flows through the kernel (folded into the value weights), so
    # no tracer error and no silently-blocked gradients under jit.
    if isinstance(gamma, (int, float)) and gamma == 0:
        return x

    B, C, T = x.shape
    d_key = w_query.shape[0]
    inv_scale = 1.0 / math.sqrt(d_key)        # module divides energy by sqrt(d_key)

    # Pad d_key to a multiple of 8 (sublane alignment); zero rows are inert in q^T k.
    dk = max(8, -(-d_key // 8) * 8)
    pad = ((0, dk - d_key), (0, 0))
    wq = jnp.pad(w_query.astype(jnp.float32), pad) * inv_scale   # fold 1/sqrt(d_key)
    wk = jnp.pad(w_key.astype(jnp.float32), pad)

    g = jnp.asarray(gamma, jnp.float32)
    # Stacked projection [W_k ; gamma*W_v ; zeros-row], bias [0 ; gamma*b_v ; 1].
    # The zero-weight / one-bias row projects to an all-ones row -> softmax denom.
    w_kv = jnp.concatenate(
        [wk, g * w_value.astype(jnp.float32), jnp.zeros((1, C), jnp.float32)], axis=0)
    b_kv = jnp.concatenate(
        [jnp.zeros((dk,), jnp.float32), g * b_value.astype(jnp.float32),
         jnp.ones((1,), jnp.float32)], axis=0).reshape(-1, 1)
    R = dk + C + 1

    # bf16 MXU operands (f32 accumulation happens in-kernel).
    wq_b = wq.astype(jnp.bfloat16)
    wkv_b = w_kv.astype(jnp.bfloat16)

    # Query tiling: TQ must be lane-dense (multiple of 128) and divide T;
    # otherwise fall back to a single full-width tile.
    if tq % 128 != 0 or T % tq != 0:
        tq = T
    nq = T // tq

    return pl.pallas_call(
        _self_attention_kernel,
        out_shape=jax.ShapeDtypeStruct((B, C, T), x.dtype),
        grid=(B, nq),
        in_specs=[
            # Full sequence: constant in the query-tile axis -> DMA'd once per batch.
            pl.BlockSpec((pl.Squeezed(), C, T), lambda b, q: (b, 0, 0)),
            # Query slice of x (projection input for q and residual).
            pl.BlockSpec((pl.Squeezed(), C, tq), lambda b, q: (b, 0, q)),
            # Weights: constant index_maps -> fetched once, VMEM-resident.
            pl.BlockSpec((dk, C), lambda b, q: (0, 0)),
            pl.BlockSpec((R, C), lambda b, q: (0, 0)),
            pl.BlockSpec((R, 1), lambda b, q: (0, 0)),
        ],
        out_specs=pl.BlockSpec((pl.Squeezed(), C, tq), lambda b, q: (b, 0, q)),
        scratch_shapes=[
            pltpu.VMEM((dk, T), jnp.bfloat16),       # keys
            pltpu.VMEM((C + 1, T), jnp.bfloat16),    # [gamma*v ; ones]
        ],
        compiler_params=pltpu.CompilerParams(
            # Batch shards across TensorCores; the query-tile axis carries the k/v
            # scratch (re-initialized at q == 0 per batch) so it stays "arbitrary".
            dimension_semantics=("parallel", "arbitrary")),
    )(x, x, wq_b, wkv_b, b_kv)


if __name__ == "__main__":
    key = jax.random.PRNGKey(0)
    kx, kq, kk, kv, kb = jax.random.split(key, 5)

    # Small shapes implied by the module: (batch, channels_in, seq_len).
    B, C, T = 2, 32, 256
    d_key = max(C // 8, 2)          # = 4, as in the module
    gamma = 0.75                    # nonzero to exercise the attention path

    x = jax.random.normal(kx, (B, C, T), dtype=jnp.float32)
    w_q = jax.random.normal(kq, (d_key, C), dtype=jnp.float32) * 0.1
    w_k = jax.random.normal(kk, (d_key, C), dtype=jnp.float32) * 0.1
    # TODO(synk): spectral_norm is a host-side weight reparametrization (power
    # iteration); the kernel consumes the already-normalized (C, C) weight.
    w_v = jax.random.normal(kv, (C, C), dtype=jnp.float32) * 0.1
    b_v = jax.random.normal(kb, (C,), dtype=jnp.float32) * 0.1

    # gamma == 0 path (the module's default): identity.
    out0 = self_attention_forward(x, w_q, w_k, w_v, b_v, gamma=0)
    assert out0 is x

    # gamma != 0 path: tq=128 gives two query tiles per batch, exercising the
    # once-per-batch k/v scratch reuse.
    out = self_attention_forward(x, w_q, w_k, w_v, b_v, gamma=gamma, tq=128)
    out = jax.block_until_ready(out)

    # Pure-JAX f32 reference.
    hp = jax.lax.Precision.HIGHEST
    scale = math.sqrt(d_key)
    q = jnp.einsum("dc,bct->bdt", w_q, x, precision=hp)
    k = jnp.einsum("dc,bct->bdt", w_k, x, precision=hp)
    v = jnp.einsum("oc,bct->bot", w_v, x, precision=hp) + b_v[None, :, None]
    energy = jnp.einsum("bdi,bdj->bij", q, k, precision=hp) / scale
    att = jax.nn.softmax(energy, axis=-1)
    out_ref = jnp.einsum("bcj,bij->bci", v, att, precision=hp)
    expected = gamma * out_ref + x

    assert out.shape == x.shape and out.dtype == x.dtype
    # bf16 MXU operands (f32 accumulation): tolerance absorbs the rounding while
    # still catching structural errors (wrong transpose / softmax axis / bias).
    assert jnp.allclose(out, expected, rtol=2e-2, atol=2e-2), float(
        jnp.max(jnp.abs(out - expected)))
    print("KERNEL_OK")
</pallas_src>

<mosaic_0001>
module attributes {stable_mosaic.version = 11 : i64} {
  func.func @_self_attention_kernel(%arg0: i32, %arg1: i32, %arg2: memref<1x32x256xf32, #tpu.memory_space<vmem>>, %arg3: memref<1x32x128xf32, #tpu.memory_space<vmem>>, %arg4: memref<8x32xbf16, #tpu.memory_space<vmem>>, %arg5: memref<41x32xbf16, #tpu.memory_space<vmem>>, %arg6: memref<41x1xf32, #tpu.memory_space<vmem>>, %arg7: memref<1x32x128xf32, #tpu.memory_space<vmem>>, %arg8: memref<8x256xbf16, #tpu.memory_space<vmem>>, %arg9: memref<33x256xbf16, #tpu.memory_space<vmem>>) attributes {dimension_semantics = [#tpu.dimension_semantics<parallel>, #tpu.dimension_semantics<arbitrary>], iteration_bounds = array<i64: 2, 2>, scalar_prefetch = 0 : i64, scratch_operands = 2 : i64, tpu.core_type = #tpu.core_type<tc>, window_params = [{transform_indices = @transform_0, window_bounds = array<i64: 1, 32, 256>}, {transform_indices = @transform_1, window_bounds = array<i64: 1, 32, 128>}, {pipeline_mode = #tpu.pipeline_mode<synchronous>, transform_indices = @transform_2, window_bounds = array<i64: 8, 32>}, {pipeline_mode = #tpu.pipeline_mode<synchronous>, transform_indices = @transform_3, window_bounds = array<i64: 41, 32>}, {pipeline_mode = #tpu.pipeline_mode<synchronous>, transform_indices = @transform_4, window_bounds = array<i64: 41, 1>}, {transform_indices = @transform_5, window_bounds = array<i64: 1, 32, 128>}]} {
    %c0_i32 = arith.constant 0 : i32
    %0 = arith.cmpi eq, %arg1, %c0_i32 : i32
    %1 = arith.extui %0 : i1 to i32
    %c0_i32_0 = arith.constant 0 : i32
    %2 = arith.cmpi ne, %1, %c0_i32_0 : i32
    scf.if %2 {
      %c0_15 = arith.constant 0 : index
      %c0_16 = arith.constant 0 : index
      %c0_17 = arith.constant 0 : index
      %28 = vector.load %arg2[%c0_15, %c0_16, %c0_17] : memref<1x32x256xf32, #tpu.memory_space<vmem>>, vector<1x32x256xf32>
      %29 = vector.shape_cast %28 : vector<1x32x256xf32> to vector<32x256xf32>
      %30 = arith.truncf %29 : vector<32x256xf32> to vector<32x256xbf16>
      %c0_18 = arith.constant 0 : index
      %c0_19 = arith.constant 0 : index
      %31 = vector.load %arg5[%c0_18, %c0_19] : memref<41x32xbf16, #tpu.memory_space<vmem>>, vector<41x32xbf16>
      %cst_20 = arith.constant dense<0.000000e+00> : vector<41x256xf32>
      %32 = tpu.matmul %31, %30, %cst_20 {dimension_numbers = #tpu.dot_dimension_numbers<[1], [0], [0], [1], [0, 0, 1, 1], [], []>} : vector<41x32xbf16>, vector<32x256xbf16>, vector<41x256xf32> -> vector<41x256xf32>
      %c0_21 = arith.constant 0 : index
      %c0_22 = arith.constant 0 : index
      %33 = vector.load %arg6[%c0_21, %c0_22] : memref<41x1xf32, #tpu.memory_space<vmem>>, vector<41x1xf32>
      %34 = vector.broadcast %33 : vector<41x1xf32> to vector<41x256xf32>
      %35 = arith.addf %32, %34 : vector<41x256xf32>
      %36 = vector.extract_strided_slice %35 {offsets = [0, 0], sizes = [8, 256], strides = [1, 1]} : vector<41x256xf32> to vector<8x256xf32>
      %37 = arith.truncf %36 : vector<8x256xf32> to vector<8x256xbf16>
      %c0_23 = arith.constant 0 : index
      %c0_24 = arith.constant 0 : index
      %38 = vector.load %arg8[%c0_23, %c0_24] : memref<8x256xbf16, #tpu.memory_space<vmem>>, vector<8x256xbf16>
      tpu.vector_store %arg8[%c0_23, %c0_24], %37 {strides = array<i32>} : memref<8x256xbf16, #tpu.memory_space<vmem>>, vector<8x256xbf16>,
      %39 = vector.extract_strided_slice %35 {offsets = [8, 0], sizes = [33, 256], strides = [1, 1]} : vector<41x256xf32> to vector<33x256xf32>
      %40 = arith.truncf %39 : vector<33x256xf32> to vector<33x256xbf16>
      %c0_25 = arith.constant 0 : index
      %c0_26 = arith.constant 0 : index
      %41 = vector.load %arg9[%c0_25, %c0_26] : memref<33x256xbf16, #tpu.memory_space<vmem>>, vector<33x256xbf16>
      tpu.vector_store %arg9[%c0_25, %c0_26], %40 {strides = array<i32>} : memref<33x256xbf16, #tpu.memory_space<vmem>>, vector<33x256xbf16>,
    } else {
    }
    %c0 = arith.constant 0 : index
    %c0_1 = arith.constant 0 : index
    %c0_2 = arith.constant 0 : index
    %3 = vector.load %arg3[%c0, %c0_1, %c0_2] : memref<1x32x128xf32, #tpu.memory_space<vmem>>, vector<1x32x128xf32>
    %4 = vector.shape_cast %3 : vector<1x32x128xf32> to vector<32x128xf32>
    %c0_3 = arith.constant 0 : index
    %c0_4 = arith.constant 0 : index
    %5 = vector.load %arg4[%c0_3, %c0_4] : memref<8x32xbf16, #tpu.memory_space<vmem>>, vector<8x32xbf16>
    %6 = arith.truncf %4 : vector<32x128xf32> to vector<32x128xbf16>
    %cst = arith.constant dense<0.000000e+00> : vector<8x128xf32>
    %7 = tpu.matmul %5, %6, %cst {dimension_numbers = #tpu.dot_dimension_numbers<[1], [0], [0], [1], [0, 0, 1, 1], [], []>} : vector<8x32xbf16>, vector<32x128xbf16>, vector<8x128xf32> -> vector<8x128xf32>
    %c0_5 = arith.constant 0 : index
    %c0_6 = arith.constant 0 : index
    %8 = vector.load %arg8[%c0_5, %c0_6] : memref<8x256xbf16, #tpu.memory_space<vmem>>, vector<8x256xbf16>
    %9 = arith.truncf %7 : vector<8x128xf32> to vector<8x128xbf16>
    %cst_7 = arith.constant dense<0.000000e+00> : vector<256x128xf32>
    %10 = tpu.matmul %8, %9, %cst_7 {dimension_numbers = #tpu.dot_dimension_numbers<[0], [0], [1], [1], [0, 1, 1, 1], [], []>} : vector<8x256xbf16>, vector<8x128xbf16>, vector<256x128xf32> -> vector<256x128xf32>
    %cst_8 = arith.constant dense<0xFF800000> : vector<128xf32>
    %11 = vector.multi_reduction <maximumf>, %10, %cst_8 [0] : vector<256x128xf32> to vector<128xf32>
    %12 = vector.shape_cast %11 : vector<128xf32> to vector<1x128xf32>
    %13 = vector.broadcast %12 : vector<1x128xf32> to vector<256x128xf32>
    %14 = arith.subf %10, %13 : vector<256x128xf32>
    %15 = math.exp %14 : vector<256x128xf32>
    %c0_9 = arith.constant 0 : index
    %c0_10 = arith.constant 0 : index
    %16 = vector.load %arg9[%c0_9, %c0_10] : memref<33x256xbf16, #tpu.memory_space<vmem>>, vector<33x256xbf16>
    %17 = arith.truncf %15 : vector<256x128xf32> to vector<256x128xbf16>
    %cst_11 = arith.constant dense<0.000000e+00> : vector<33x128xf32>
    %18 = tpu.matmul %16, %17, %cst_11 {dimension_numbers = #tpu.dot_dimension_numbers<[1], [0], [0], [1], [0, 0, 1, 1], [], []>} : vector<33x256xbf16>, vector<256x128xbf16>, vector<33x128xf32> -> vector<33x128xf32>
    %19 = vector.extract_strided_slice %18 {offsets = [32, 0], sizes = [1, 128], strides = [1, 1]} : vector<33x128xf32> to vector<1x128xf32>
    %20 = tpu.reciprocal %19 {approx = true} : vector<1x128xf32> -> vector<1x128xf32>
    %21 = vector.extract_strided_slice %18 {offsets = [0, 0], sizes = [32, 128], strides = [1, 1]} : vector<33x128xf32> to vector<32x128xf32>
    %22 = vector.broadcast %20 : vector<1x128xf32> to vector<32x128xf32>
    %23 = arith.mulf %21, %22 : vector<32x128xf32>
    %24 = arith.addf %23, %4 : vector<32x128xf32>
    %c0_12 = arith.constant 0 : index
    %c0_13 = arith.constant 0 : index
    %c0_14 = arith.constant 0 : index
    %25 = vector.load %arg7[%c0_12, %c0_13, %c0_14] : memref<1x32x128xf32, #tpu.memory_space<vmem>>, vector<1x32x128xf32>
    %26 = vector.shape_cast %25 : vector<1x32x128xf32> to vector<32x128xf32>
    %27 = vector.shape_cast %24 : vector<32x128xf32> to vector<1x32x128xf32>
    tpu.vector_store %arg7[%c0_12, %c0_13, %c0_14], %27 {strides = array<i32>} : memref<1x32x128xf32, #tpu.memory_space<vmem>>, vector<1x32x128xf32>,
    return
  }
  func.func @transform_0(%arg0: i32, %arg1: i32) -> (i32, i32, i32) {
    %c0_i32 = arith.constant 0 : i32
    %c0_i32_0 = arith.constant 0 : i32
    %c0_i32_1 = arith.constant 0 : i32
    return %arg0, %c0_i32, %c0_i32_0 : i32, i32, i32
  }
  func.func @transform_1(%arg0: i32, %arg1: i32) -> (i32, i32, i32) {
    %c0_i32 = arith.constant 0 : i32
    %c0_i32_0 = arith.constant 0 : i32
    return %arg0, %c0_i32, %arg1 : i32, i32, i32
  }
  func.func @transform_2(%arg0: i32, %arg1: i32) -> (i32, i32) {
    %c0_i32 = arith.constant 0 : i32
    %c0_i32_0 = arith.constant 0 : i32
    %c0_i32_1 = arith.constant 0 : i32
    return %c0_i32, %c0_i32_0 : i32, i32
  }
  func.func @transform_3(%arg0: i32, %arg1: i32) -> (i32, i32) {
    %c0_i32 = arith.constant 0 : i32
    %c0_i32_0 = arith.constant 0 : i32
    %c0_i32_1 = arith.constant 0 : i32
    return %c0_i32, %c0_i32_0 : i32, i32
  }
  func.func @transform_4(%arg0: i32, %arg1: i32) -> (i32, i32) {
    %c0_i32 = arith.constant 0 : i32
    %c0_i32_0 = arith.constant 0 : i32
    %c0_i32_1 = arith.constant 0 : i32
    return %c0_i32, %c0_i32_0 : i32, i32
  }
  func.func @transform_5(%arg0: i32, %arg1: i32) -> (i32, i32, i32) {
    %c0_i32 = arith.constant 0 : i32
    %c0_i32_0 = arith.constant 0 : i32
    return %arg0, %c0_i32, %arg1 : i32, i32, i32
  }
}

</mosaic_0001>

<llo_original>
// kernel: tpu_custom_call.1
$region0: #{tpu_custom_call.1}
  #allocation0 [shape = 'u32[]', space=smem, size = 0x4, offset = 0x4, fixed_abs, tag = 'smem constant byte address 0x4 - core index']
  #allocation1 [shape = 'u32[144,128]{1,0:T(1,128)}', space=vmem, size = 0x12000, scoped, tag = 'internal scratch']
  #allocation2 [shape = 'bf16[8,256]{1,0:T(8,128)(2,1)}', space=vmem, size = 0x1000, scoped, tag = 'scratch operand']
  #allocation3 [shape = 'bf16[33,256]{1,0:T(8,128)(2,1)}', space=vmem, size = 0x5000, scoped, tag = 'scratch operand']
  %s0 = inlined_call_operand.hbm [shape: f32[2,32,256], index: 0, kind: input, shape index: {}]
  %s1 = inlined_call_operand.hbm [shape: f32[2,32,256], index: 1, kind: input, shape index: {}]
  %s2 = inlined_call_operand.vmem [shape: bf16[8,32], index: 2, kind: input, shape index: {}]
  %s3 = inlined_call_operand.vmem [shape: bf16[41,32], index: 3, kind: input, shape index: {}]
  %s4 = inlined_call_operand.vmem [shape: f32[41,1], index: 4, kind: input, shape index: {}]
  %s5 = inlined_call_operand.hbm [shape: f32[2,32,256], index: 5, kind: output, shape index: {}]
  %s6 = sld [smem:[#allocation0]]
  $region65: #{tpu_custom_call.1} parent=0
    _
  %s8 = ssub.s32 1, %s6
  %s9 = scalar_select 0, %s8, %s6
  $region1: #{tpu_custom_call.1} parent=0
    #allocation4 [shape = 'u8[65536]{0}', space=vmem, size = 0x10000, scoped, tag = 'input window, operand 0']
    #allocation5 [shape = 's32[2]{0}', space=sflag, size = 0x8, scoped, tag = 'scoped memory for tpu_custom_call.1']
    #allocation6 [shape = 's32[2]{0}', space=sflag, size = 0x8, scoped, tag = 'scoped memory for tpu_custom_call.1']
    #allocation7 [shape = 'u8[32768]{0}', space=vmem, size = 0x8000, scoped, tag = 'input window, operand 1']
    #allocation8 [shape = 's32[2]{0}', space=sflag, size = 0x8, scoped, tag = 'scoped memory for tpu_custom_call.1']
    #allocation9 [shape = 'u8[32768]{0}', space=vmem, size = 0x8000, scoped, tag = 'output window, operand 0']
    %10 = vsyncpa [#allocation5], 0
    %s11 = scalar_lea.sflag [#allocation5], 1
    %12 = vsyncpa %s11, 0
    %13 = vsyncpa [#allocation8], 0
    %s14 = scalar_lea.sflag [#allocation8], 1
    %15 = vsyncpa %s14, 0
    %16 = vsyncpa [#allocation6], 0
    %s17 = scalar_lea.sflag [#allocation6], 1
    %18 = vsyncpa %s17, 0
    loop: start=0, step=1, limit=6
    $region2: #{tpu_custom_call.1} parent=1 // loop_pre_header
      _
    $region3: #{tpu_custom_call.1} parent=1 // loop_header
      %s20 = sphi 0, %s24
      %p21 = scmp.ge.s32.totalorder %s20, 6
      %s27 = sphi 0, %s39
      %s28 = sphi 0, %s35
      %s29 = sphi 0, %s27
      %s30 = sphi 0, %s28
      %s31 = sphi 0, %s29
      %s32 = sphi 0, %s30
      %s42 = sphi 0, %s44
      %s45 = sphi 0, %s42
      %s46 = sphi 0, %s45
      %s62 = sphi 0, %s46
      %s70 = sphi 0, %s72
      %s73 = sphi 0, %s70
      %s74 = sphi 0, %s73
      %s90 = sphi 0, %s74
      %s94 = sphi 0, %s94
      %s96 = sphi 0, %s94
      %s97 = sphi 0, %s96
      %s111 = sphi 0, %s97
      %s115 = sphi 0, %s115
      %s117 = sphi 0, %s115
      %s118 = sphi 0, %s117
      %s132 = sphi 0, %s118
      %s136 = sphi 0, %s136
      %s138 = sphi 0, %s136
      %s139 = sphi 0, %s138
      %s153 = sphi 0, %s139
      %s161 = sphi 0, %s163
      %s164 = sphi 0, %s161
      %s165 = sphi 0, %s164
      %s181 = sphi 0, %s165
    $region4: #{tpu_custom_call.1} parent=1 // loop_header_branch
      %23 = sbr.rel (%p21) target = $region8
    $region5: #{tpu_custom_call.1} parent=1 // loop_body
      %s25 = ssub.s32 %s20, 1
      %s26 = ssub.s32 %s20, 2
      %s33 = sadd.s32 1, %s28
      %p34 = scmp.ge.s32.totalorder %s33, 2
      %s35 = scalar_select %p34, 0, %s33
      %s36 = sadd.s32 1, %s27
      %s37 = scalar_select %p34, %s36, %s27
      %p38 = scmp.ge.s32.totalorder %s37, 2
      %s39 = scalar_select %p38, 0, %s37
      %s40 = ssub.s32 %s27, %s39
      %p41 = scmp.eq.s32.totalorder %s40, 0
      %s43 = sadd.s32 %s42, 1
      %s44 = scalar_select %p41, %s42, %s43
      %p47 = pneg %p41
      %p48 = scmp.eq.s32.totalorder %s20, 3
      %p49 = por %p47, %p48
      %p50 = scmp.ne.s32.totalorder %s42, %s45
      %p51 = scmp.eq.s32.totalorder %s20, 0
      %p52 = por %p50, %p51
      %p53 = scmp.ne.s32.totalorder %s42, %s45
      %p54 = scmp.eq.s32.totalorder %s25, 3
      %p55 = por %p53, %p54
      %p56 = scmp.ne.s32.totalorder %s45, %s46
      %p57 = scmp.eq.s32.totalorder %s25, 0
      %p58 = por %p56, %p57
      %p59 = scmp.ne.s32.totalorder %s45, %s46
      %p60 = scmp.eq.s32.totalorder %s26, 3
      %p61 = por %p59, %p60
      %p63 = scmp.ne.s32.totalorder %s46, %s62
      %p64 = scmp.eq.s32.totalorder %s26, 0
      %p65 = por %p63, %p64
      %s66 = ssub.s32 %s27, %s39
      %s67 = ssub.s32 %s28, %s35
      %s68 = sor.u32 %s66, %s67
      %p69 = scmp.eq.s32.totalorder %s68, 0
      %s71 = sadd.s32 %s70, 1
      %s72 = scalar_select %p69, %s70, %s71
      %p75 = pneg %p69
      %p76 = scmp.eq.s32.totalorder %s20, 3
      %p77 = por %p75, %p76
      %p78 = scmp.ne.s32.totalorder %s70, %s73
      %p79 = scmp.eq.s32.totalorder %s20, 0
      %p80 = por %p78, %p79
      %p81 = scmp.ne.s32.totalorder %s70, %s73
      %p82 = scmp.eq.s32.totalorder %s25, 3
      %p83 = por %p81, %p82
      %p84 = scmp.ne.s32.totalorder %s73, %s74
      %p85 = scmp.eq.s32.totalorder %s25, 0
      %p86 = por %p84, %p85
      %p87 = scmp.ne.s32.totalorder %s73, %s74
      %p88 = scmp.eq.s32.totalorder %s26, 3
      %p89 = por %p87, %p88
      %p91 = scmp.ne.s32.totalorder %s74, %s90
      %p92 = scmp.eq.s32.totalorder %s26, 0
      %p93 = por %p91, %p92
      %s95 = sadd.s32 %s94, 1
      %p98 = scmp.eq.s32.totalorder %s20, 3
      %p99 = scmp.ne.s32.totalorder %s94, %s96
      %p100 = scmp.eq.s32.totalorder %s20, 0
      %p101 = por %p99, %p100
      %p102 = scmp.ne.s32.totalorder %s94, %s96
      %p103 = scmp.eq.s32.totalorder %s25, 3
      %p104 = por %p102, %p103
      %p105 = scmp.ne.s32.totalorder %s96, %s97
      %p106 = scmp.eq.s32.totalorder %s25, 0
      %p107 = por %p105, %p106
      %p108 = scmp.ne.s32.totalorder %s96, %s97
      %p109 = scmp.eq.s32.totalorder %s26, 3
      %p110 = por %p108, %p109
      %p112 = scmp.ne.s32.totalorder %s97, %s111
      %p113 = scmp.eq.s32.totalorder %s26, 0
      %p114 = por %p112, %p113
      %s116 = sadd.s32 %s115, 1
      %p119 = scmp.eq.s32.totalorder %s20, 3
      %p120 = scmp.ne.s32.totalorder %s115, %s117
      %p121 = scmp.eq.s32.totalorder %s20, 0
      %p122 = por %p120, %p121
      %p123 = scmp.ne.s32.totalorder %s115, %s117
      %p124 = scmp.eq.s32.totalorder %s25, 3
      %p125 = por %p123, %p124
      %p126 = scmp.ne.s32.totalorder %s117, %s118
      %p127 = scmp.eq.s32.totalorder %s25, 0
      %p128 = por %p126, %p127
      %p129 = scmp.ne.s32.totalorder %s117, %s118
      %p130 = scmp.eq.s32.totalorder %s26, 3
      %p131 = por %p129, %p130
      %p133 = scmp.ne.s32.totalorder %s118, %s132
      %p134 = scmp.eq.s32.totalorder %s26, 0
      %p135 = por %p133, %p134
      %s137 = sadd.s32 %s136, 1
      %p140 = scmp.eq.s32.totalorder %s20, 3
      %p141 = scmp.ne.s32.totalorder %s136, %s138
      %p142 = scmp.eq.s32.totalorder %s20, 0
      %p143 = por %p141, %p142
      %p144 = scmp.ne.s32.totalorder %s136, %s138
      %p145 = scmp.eq.s32.totalorder %s25, 3
      %p146 = por %p144, %p145
      %p147 = scmp.ne.s32.totalorder %s138, %s139
      %p148 = scmp.eq.s32.totalorder %s25, 0
      %p149 = por %p147, %p148
      %p150 = scmp.ne.s32.totalorder %s138, %s139
      %p151 = scmp.eq.s32.totalorder %s26, 3
      %p152 = por %p150, %p151
      %p154 = scmp.ne.s32.totalorder %s139, %s153
      %p155 = scmp.eq.s32.totalorder %s26, 0
      %p156 = por %p154, %p155
      %s157 = ssub.s32 %s27, %s39
      %s158 = ssub.s32 %s28, %s35
      %s159 = sor.u32 %s157, %s158
      %p160 = scmp.eq.s32.totalorder %s159, 0
      %s162 = sadd.s32 %s161, 1
      %s163 = scalar_select %p160, %s161, %s162
      %p166 = pneg %p160
      %p167 = scmp.eq.s32.totalorder %s20, 3
      %p168 = por %p166, %p167
      %p169 = scmp.ne.s32.totalorder %s161, %s164
      %p170 = scmp.eq.s32.totalorder %s20, 0
      %p171 = por %p169, %p170
      %p172 = scmp.ne.s32.totalorder %s161, %s164
      %p173 = scmp.eq.s32.totalorder %s25, 3
      %p174 = por %p172, %p173
      %p175 = scmp.ne.s32.totalorder %s164, %s165
      %p176 = scmp.eq.s32.totalorder %s25, 0
      %p177 = por %p175, %p176
      %p178 = scmp.ne.s32.totalorder %s164, %s165
      %p179 = scmp.eq.s32.totalorder %s26, 3
      %p180 = por %p178, %p179
      %p182 = scmp.ne.s32.totalorder %s165, %s181
      %p183 = scmp.eq.s32.totalorder %s26, 0
      %p184 = por %p182, %p183
      %p185 = scmp.le.s32.totalorder 1, %s20
      %p186 = scmp.lt.s32.totalorder %s20, 5
      %p187 = pnand %p185, %p186
      %p188 = pneg %p187
      // Predicated region
      $region9: #{tpu_custom_call.1} parent=5 // pred_check
        _
      $region10: #{tpu_custom_call.1} parent=5 // pred_check_branch
        %190 = sbr.rel (%p187) target = $region12
      $region11: #{tpu_custom_call.1} parent=5 // pred_region
        %s191 = ssub.s32 %s20, 1
        // Predicated region
        $region13: #{tpu_custom_call.1} parent=11 // pred_check
          %p192 = pneg %p107
        $region14: #{tpu_custom_call.1} parent=11 // pred_check_branch
          %194 = sbr.rel (%p192) target = $region16
        $region15: #{tpu_custom_call.1} parent=11 // pred_region
          _
        $region16: #{tpu_custom_call.1} parent=11 // pred_fallthru
          _
        // Predicated region
        $region17: #{tpu_custom_call.1} parent=11 // pred_check
          %p195 = pneg %p128
        $region18: #{tpu_custom_call.1} parent=11 // pred_check_branch
          %197 = sbr.rel (%p195) target = $region20
        $region19: #{tpu_custom_call.1} parent=11 // pred_region
          _
        $region20: #{tpu_custom_call.1} parent=11 // pred_fallthru
          _
        // Predicated region
        $region21: #{tpu_custom_call.1} parent=11 // pred_check
          %p198 = pneg %p149
        $region22: #{tpu_custom_call.1} parent=11 // pred_check_branch
          %200 = sbr.rel (%p198) target = $region24
        $region23: #{tpu_custom_call.1} parent=11 // pred_region
          _
        $region24: #{tpu_custom_call.1} parent=11 // pred_fallthru
          _
      $region12: #{tpu_custom_call.1} parent=5 // pred_fallthru
        _
      %p201 = scmp.lt.s32.totalorder %s20, 4
      // Predicated region
      $region25: #{tpu_custom_call.1} parent=5 // pred_check
        %p202 = pneg %p201
      $region26: #{tpu_custom_call.1} parent=5 // pred_check_branch
        %204 = sbr.rel (%p202) target = $region28
      $region27: #{tpu_custom_call.1} parent=5 // pred_region
        // Predicated region
        $region29: #{tpu_custom_call.1} parent=27 // pred_check
          %p205 = pneg %p52
        $region30: #{tpu_custom_call.1} parent=27 // pred_check_branch
          %207 = sbr.rel (%p205) target = $region32
        $region31: #{tpu_custom_call.1} parent=27 // pred_region
          %s208 = sand.u32 %s42, 1
          %s209 = scalar_lea.sflag [#allocation5], %s208
          %s210 = sand.u32 %s42, 1
          %s211 = smul.addr %s210, 64
          %s212 = scalar_lea.vmem [#allocation4], %s211
          %s214 = ssub.s32 1024, 1024
          %215 = vsyncadd %s209, %s214
          %s216 = smul.addr %s27, 8
          %s217 = smul.addr %s216, 128
          %s218 = scalar_lea.hbm %s0, %s217
          %s219 = sshll.u32 %s212, 4
          %s220 = int_to_ptr.vmem [resolvable:$true] %s219
          %225 = dma.hbm_to_vmem [thread:$0]  %s218, 1024, %s220, %s209, 256, 256, 16
        $region32: #{tpu_custom_call.1} parent=27 // pred_fallthru
          _
        // Predicated region
        $region33: #{tpu_custom_call.1} parent=27 // pred_check
          %p226 = pneg %p80
        $region34: #{tpu_custom_call.1} parent=27 // pred_check_branch
          %228 = sbr.rel (%p226) target = $region36
        $region35: #{tpu_custom_call.1} parent=27 // pred_region
          %s229 = sand.u32 %s70, 1
          %s230 = scalar_lea.sflag [#allocation8], %s229
          %s231 = sand.u32 %s70, 1
          %s232 = smul.addr %s231, 32
          %s233 = scalar_lea.vmem [#allocation7], %s232
          %s235 = ssub.s32 512, 512
          %236 = vsyncadd %s230, %s235
          %s237 = smul.addr %s27, 8
          %s238 = sadd.s32 %s28, %s237
          %s239 = smul.addr %s238, 128
          %s240 = scalar_lea.hbm %s1, %s239
          %s241 = sshll.u32 %s233, 4
          %s242 = int_to_ptr.vmem [resolvable:$true] %s241
          %247 = dma.hbm_to_vmem [thread:$0]  %s240, 512, %s242, %s230, 256, 128, 8
        $region36: #{tpu_custom_call.1} parent=27 // pred_fallthru
          _
      $region28: #{tpu_custom_call.1} parent=5 // pred_fallthru
        _
      %p248 = scmp.le.s32.totalorder 1, %s20
      %p249 = scmp.lt.s32.totalorder %s20, 5
      %p250 = pnand %p248, %p249
      %p251 = pneg %p250
      // Predicated region
      $region37: #{tpu_custom_call.1} parent=5 // pred_check
        _
      $region38: #{tpu_custom_call.1} parent=5 // pred_check_branch
        %253 = sbr.rel (%p250) target = $region40
      $region39: #{tpu_custom_call.1} parent=5 // pred_region
        %s254 = ssub.s32 %s20, 1
        %s255 = sand.u32 %s45, 1
        %s256 = scalar_lea.sflag [#allocation5], %s255
        %s257 = sand.u32 %s45, 1
        %s258 = smul.addr %s257, 64
        %s259 = scalar_lea.vmem [#allocation4], %s258
        // Predicated region
        $region41: #{tpu_custom_call.1} parent=39 // pred_check
          %p260 = pneg %p58
        $region42: #{tpu_custom_call.1} parent=39 // pred_check_branch
          %262 = sbr.rel (%p260) target = $region44
        $region43: #{tpu_custom_call.1} parent=39 // pred_region
          %263 = dma.done %s256, 1024
        $region44: #{tpu_custom_call.1} parent=39 // pred_fallthru
          _
        %s264 = sand.u32 %s73, 1
        %s265 = scalar_lea.sflag [#allocation8], %s264
        %s266 = sand.u32 %s73, 1
        %s267 = smul.addr %s266, 32
        %s268 = scalar_lea.vmem [#allocation7], %s267
        // Predicated region
        $region45: #{tpu_custom_call.1} parent=39 // pred_check
          %p269 = pneg %p86
        $region46: #{tpu_custom_call.1} parent=39 // pred_check_branch
          %271 = sbr.rel (%p269) target = $region48
        $region47: #{tpu_custom_call.1} parent=39 // pred_region
          %272 = dma.done %s265, 512
        $region48: #{tpu_custom_call.1} parent=39 // pred_fallthru
          _
        %s273 = sand.u32 %s45, 1
        %s274 = scalar_lea.sflag [#allocation5], %s273
        %s275 = sand.u32 %s45, 1
        %s276 = smul.addr %s275, 64
        %s277 = scalar_lea.vmem [#allocation4], %s276
        %p278 = pneg %p58
        %p279 = pneg %p55
        %s280 = sand.u32 %s73, 1
        %s281 = scalar_lea.sflag [#allocation8], %s280
        %s282 = sand.u32 %s73, 1
        %s283 = smul.addr %s282, 32
        %s284 = scalar_lea.vmem [#allocation7], %s283
        %p285 = pneg %p86
        %p286 = pneg %p83
        %p287 = pneg %p107
        %p288 = pneg %p104
        %p289 = pneg %p128
        %p290 = pneg %p125
        %p291 = pneg %p149
        %p292 = pneg %p146
        %p293 = pneg %p177
        %p294 = pneg %p174
        %s295 = sand.u32 %s164, 1
        %s296 = scalar_lea.sflag [#allocation6], %s295
        %s297 = sand.u32 %s164, 1
        %s298 = smul.addr %s297, 32
        %s299 = scalar_lea.vmem [#allocation9], %s298
        %p301 = scmp.eq.s32.totalorder %s30, 0
        // Predicated region
        $region49: #{tpu_custom_call.1} parent=39 // pred_check
          %p302 = pneg %p301
        $region50: #{tpu_custom_call.1} parent=39 // pred_check_branch
          %304 = sbr.rel (%p302) target = $region52
        $region51: #{tpu_custom_call.1} parent=39 // pred_region
          %v305 = vld [vmem:[%s259] sm:$0xff]
          %v306 = vld [vmem:[%s259 + $0x8] sm:$0xff]
          %v307 = vld [vmem:[%s259 + $0x10] sm:$0xff]
          %v308 = vld [vmem:[%s259 + $0x18] sm:$0xff]
          %v309 = vld [vmem:[%s259 + $0x20] sm:$0xff]
          %v310 = vld [vmem:[%s259 + $0x28] sm:$0xff]
          %v311 = vld [vmem:[%s259 + $0x30] sm:$0xff]
          %v312 = vld [vmem:[%s259 + $0x38] sm:$0xff]
          %v313 = vpack.c.bf16 %v307, %v305
          %v314 = vpack.c.bf16 %v308, %v306
          %v315 = vpack.c.bf16 %v311, %v309
          %v316 = vpack.c.bf16 %v312, %v310
          %v317 = vld [vmem:[%s3] sm:$0xf]
          %v318 = vld [vmem:[%s3 + $0x4] sm:$0xf]
          %v319 = vld [vmem:[%s3 + $0x8] sm:$0xf]
          %v320 = vld [vmem:[%s3 + $0xc] sm:$0xf]
          %v321 = vld [vmem:[%s3 + $0x10] sm:$0xf]
          %v322 = vld [vmem:[%s3 + $0x14] sm:$0x1]
          %v323 = vld [vmem:[%s4] sm:$0xff]
          %v324 = vld [vmem:[%s4 + $0x8] sm:$0xff]
          %v325 = vld [vmem:[%s4 + $0x10] sm:$0xff]
          %v326 = vld [vmem:[%s4 + $0x18] sm:$0xff]
          %v327 = vld [vmem:[%s4 + $0x20] sm:$0xff]
          %v328 = vld [vmem:[%s4 + $0x28] sm:$0x1]
          %330 = vset.pattern.permute.xlu0 0
          %331 = vperm.xlu0 %330, %v323
          %v332 = vpop.permute.xlu0 %331
          %335 = vset.pattern.permute.xlu0 0
          %336 = vperm.xlu0 %335, %v324
          %v337 = vpop.permute.xlu0 %336
          %340 = vset.pattern.permute.xlu0 0
          %341 = vperm.xlu0 %340, %v325
          %v342 = vpop.permute.xlu0 %341
          %345 = vset.pattern.permute.xlu0 0
          %346 = vperm.xlu0 %345, %v326
          %v347 = vpop.permute.xlu0 %346
          %350 = vset.pattern.permute.xlu0 0
          %351 = vperm.xlu0 %350, %v327
          %v352 = vpop.permute.xlu0 %351
          %355 = vset.pattern.permute.xlu0 0
          %356 = vperm.xlu0 %355, %v328
          %v357 = vpop.permute.xlu0 %356
          %v365 = vunpack.c.l.b16 %v317
          %v366 = vunpack.c.l.b16 %v318
          %v367 = vunpack.c.l.b16 %v319
          %v368 = vunpack.c.l.b16 %v320
          %v369 = vunpack.c.l.b16 %v321
          %v370 = vunpack.c.l.b16 %v322
          %v371 = vpack.c.b16 %v366, %v365
          %v372 = vpack.c.b16 %v368, %v367
          %v373 = vpack.c.b16 %v370, %v369
          %vm374 = vcmask 261120
          %v376 = vsel %vm374, %v371, 0
          %v379 = vsel %vm374, %v372, 0
          %v382 = vsel %vm374, %v373, 0
          %384 = vmatprep.subr.bf16.mxu0 0
          %385 = vmatpush1.bf16.msra.mxu0 0
          %386 = vmatprep.subr.bf16.mxu0 0
          %387 = vmatpush1.bf16.msra.mxu0 0
          %388 = vmatprep.subr.bf16.mxu0 0
          %389 = vmatpush1.bf16.msra.mxu0 0
          %390 = vmatprep.subr.bf16.mxu0 0
          %391 = vmatpush1.bf16.msra.mxu0 0
          %392 = vmatprep.subr.bf16.mxu0 0
          %393 = vmatpush1.bf16.msra.mxu0 0
          %394 = vmatprep.subr.bf16.mxu0 0
          %395 = vmatpush1.bf16.msra.mxu0 0
          %396 = vmatprep.subr.bf16.mxu0 %v316
          %397 = vmatpush1.bf16.msra.mxu0 %v315
          %398 = vmatprep.subr.bf16.mxu0 %v314
          %399 = vmatpush1.bf16.msra.mxu0 %v313
          %400 = vmatprep.subr.bf16.mxu0 0
          %401 = vmatpush2.bf16.msra.mxu0 0
          %402 = vmatprep.subr.bf16.mxu0 0
          %403 = vmatpush2.bf16.msra.mxu0 0
          %404 = vmatprep.subr.bf16.mxu0 0
          %405 = vmatpush2.bf16.msra.mxu0 0
          %406 = vmatprep.subr.bf16.mxu0 0
          %407 = vmatpush2.bf16.msra.mxu0 0
          %408 = vmatprep.subr.bf16.mxu0 0
          %409 = vmatpush2.bf16.msra.mxu0 0
          %410 = vmatprep.subr.bf16.mxu0 0
          %411 = vmatpush2.bf16.msra.mxu0 0
          %412 = vmatprep.subr.bf16.mxu0 0
          %413 = vmatpush2.bf16.msra.mxu0 0
          %414 = vmatprep.subr.bf16.mxu0 0
          %415 = vmatpush2.bf16.msra.mxu0 0
          %416 = vmatprep.mubr.bf16.mxu0 0
          %417 = vmatmul.mubr.bf16.gmra.mxu0 %v376
          %v418 = vpop.f32.mrf.mxu0
          %v419 = vadd.f32 %v332, %v418
          %v420 = vpop.f32.mrf.mxu0
          %v421 = vadd.f32 %v332, %v420
          %v422 = vpop.f32.mrf.mxu0
          %v423 = vadd.f32 %v337, %v422
          %v424 = vpop.f32.mrf.mxu0
          %v425 = vadd.f32 %v337, %v424
          %426 = vmatprep.mubr.bf16.mxu0 0
          %427 = vmatmul.mubr.bf16.gmra.mxu0 %v379
          %v428 = vpop.f32.mrf.mxu0
          %v429 = vadd.f32 %v342, %v428
          %v430 = vpop.f32.mrf.mxu0
          %v431 = vadd.f32 %v342, %v430
          %v432 = vpop.f32.mrf.mxu0
          %v433 = vadd.f32 %v347, %v432
          %v434 = vpop.f32.mrf.mxu0
          %v435 = vadd.f32 %v347, %v434
          %436 = vmatprep.mubr.bf16.mxu0 0
          %437 = vmatmul.mubr.bf16.gmra.mxu0 %v382
          %v438 = vpop.f32.mrf.mxu0
          %v439 = vadd.f32 %v352, %v438
          %v440 = vpop.f32.mrf.mxu0
          %v441 = vadd.f32 %v352, %v440
          %v442 = vpop.f32.mrf.mxu0
          %v443 = vadd.f32 %v357, %v442
          %v444 = vpop.f32.mrf.mxu0
          %v445 = vadd.f32 %v357, %v444
          %446 = vdwg.mxu0
          %v447 = vpack.c.bf16 %v419, %v419
          %v448 = vpack.c.bf16 %v421, %v421
          %v451 = vunpack.c.l.b16 %v447
          %v452 = vunpack.c.l.b16 %v448
          %v453 = vpack.c.b16 %v452, %v451
          %455 = vst [vmem:[#allocation2] sm:$0xff] %v453
          %v456 = vpack.c.bf16 %v429, %v423
          %v457 = vpack.c.bf16 %v431, %v425
          %v458 = vpack.c.bf16 %v439, %v433
          %v459 = vpack.c.bf16 %v441, %v435
          %v460 = vpack.c.bf16 %v443, %v443
          %v461 = vpack.c.bf16 %v445, %v445
          %v468 = vunpack.c.l.b16 %v456
          %v469 = vunpack.c.l.b16 %v457
          %v470 = vunpack.c.h.b16 %v456
          %v471 = vunpack.c.h.b16 %v457
          %v472 = vunpack.c.l.b16 %v458
          %v473 = vunpack.c.l.b16 %v459
          %v474 = vunpack.c.h.b16 %v458
          %v475 = vunpack.c.h.b16 %v459
          %v476 = vunpack.c.l.b16 %v460
          %v477 = vunpack.c.l.b16 %v461
          %v478 = vpack.c.b16 %v469, %v468
          %v479 = vpack.c.b16 %v471, %v470
          %v480 = vpack.c.b16 %v473, %v472
          %v481 = vpack.c.b16 %v475, %v474
          %v482 = vpack.c.b16 %v477, %v476
          %488 = vst [vmem:[#allocation3] sm:$0xff] %v478
          %489 = vst [vmem:[#allocation3 + $0x8] sm:$0xff] %v479
          %490 = vst [vmem:[#allocation3 + $0x10] sm:$0xff] %v480
          %491 = vst [vmem:[#allocation3 + $0x18] sm:$0xff] %v481
          %vm492 = vcmask 1040384
          %vm493 = vsmask.f32 256
          %vm494 = vmand %vm492, %vm493
          %vm495 = vcmask 1044484
          %vm496 = vsmask.f32 4352
          %vm497 = vmand %vm495, %vm496
          %vm498 = vmor %vm497, %vm494
          %v499 = vld [vmem:[#allocation3 + $0x20] sm:$0x11]
          %v500 = vsel %vm498, %v482, %v499
          %501 = vst [vmem:[#allocation3 + $0x20] sm:$0x11] %v500
        $region52: #{tpu_custom_call.1} parent=39 // pred_fallthru
          _
        %v502 = vld [vmem:[%s268] sm:$0xff]
        %v503 = vld [vmem:[%s268 + $0x8] sm:$0xff]
        %v504 = vld [vmem:[%s268 + $0x10] sm:$0xff]
        %v505 = vld [vmem:[%s268 + $0x18] sm:$0xff]
        %v506 = vld [vmem:[%s2] sm:$0xf]
        %v507 = vpack.c.bf16 %v503, %v502
        %v508 = vpack.c.bf16 %v505, %v504
        %vm509 = vcmask 261120
        %v511 = vsel %vm509, %v506, 0
        %513 = vmatprep.subr.bf16.mxu0 0
        %514 = vmatpush1.bf16.msra.mxu0 0
        %515 = vmatprep.subr.bf16.mxu0 0
        %516 = vmatpush1.bf16.msra.mxu0 0
        %517 = vmatprep.subr.bf16.mxu0 0
        %518 = vmatpush1.bf16.msra.mxu0 0
        %519 = vmatprep.subr.bf16.mxu0 0
        %520 = vmatpush1.bf16.msra.mxu0 0
        %521 = vmatprep.subr.bf16.mxu0 0
        %522 = vmatpush1.bf16.msra.mxu0 0
        %523 = vmatprep.subr.bf16.mxu0 0
        %524 = vmatpush1.bf16.msra.mxu0 0
        %525 = vmatprep.subr.bf16.mxu0 0
        %526 = vmatpush1.bf16.msra.mxu0 %v508
        %527 = vmatprep.subr.bf16.mxu0 0
        %528 = vmatpush1.bf16.msra.mxu0 %v507
        %529 = vmatprep.subr.bf16.mxu0 0
        %530 = vmatpush2.bf16.msra.mxu0 0
        %531 = vmatprep.subr.bf16.mxu0 0
        %532 = vmatpush2.bf16.msra.mxu0 0
        %533 = vmatprep.subr.bf16.mxu0 0
        %534 = vmatpush2.bf16.msra.mxu0 0
        %535 = vmatprep.subr.bf16.mxu0 0
        %536 = vmatpush2.bf16.msra.mxu0 0
        %537 = vmatprep.subr.bf16.mxu0 0
        %538 = vmatpush2.bf16.msra.mxu0 0
        %539 = vmatprep.subr.bf16.mxu0 0
        %540 = vmatpush2.bf16.msra.mxu0 0
        %541 = vmatprep.subr.bf16.mxu0 0
        %542 = vmatpush2.bf16.msra.mxu0 0
        %543 = vmatprep.subr.bf16.mxu0 0
        %544 = vmatpush2.bf16.msra.mxu0 0
        %545 = vmatprep.mubr.bf16.mxu0 0
        %546 = vmatmul.mubr.bf16.gmra.mxu0 %v511
        %v547 = vpop.f32.mrf.mxu0
        %v548 = vadd.f32 0.0, %v547
        %v549 = vpop.f32.mrf.mxu0
        %v550 = vpop.f32.mrf.mxu0
        %v551 = vpop.f32.mrf.mxu0
        %552 = vdwg.mxu0
        %v553 = vld [vmem:[#allocation2] sm:$0xff]
        %v554 = vpack.c.bf16 %v548, %v548
        %v556 = vunpack.c.l.b16 %v553
        %v557 = vunpack.c.h.b16 %v553
        %v558 = vpack.c.b16 %v556, %v556
        %v559 = vpack.c.b16 %v557, %v557
        %562 = vxpose.xlu0.c.b16.start [1/8] %v558, 128
        %563 = vxpose.xlu0.c.b16.cont [2/8] 0, 128
        %564 = vxpose.xlu0.c.b16.cont [3/8] 0, 128
        %565 = vxpose.xlu0.c.b16.cont [4/8] 0, 128
        %566 = vxpose.xlu0.c.b16.cont [5/8] 0, 128
        %567 = vxpose.xlu0.c.b16.cont [6/8] 0, 128
        %568 = vxpose.xlu0.c.b16.cont [7/8] 0, 128
        %569 = vxpose.xlu0.c.b16.end [8/8] 0, 128
        %v570 = vpop.trf.xlu0
        %v571 = vpop.trf.xlu0
        %v572 = vpop.trf.xlu0
        %v573 = vpop.trf.xlu0
        %v574 = vpop.trf.xlu0
        %v575 = vpop.trf.xlu0
        %v576 = vpop.trf.xlu0
        %v577 = vpop.trf.xlu0
        %578 = vxpose.xlu0.c.b16.start [1/8] %v559, 128
        %579 = vxpose.xlu0.c.b16.cont [2/8] 0, 128
        %580 = vxpose.xlu0.c.b16.cont [3/8] 0, 128
        %581 = vxpose.xlu0.c.b16.cont [4/8] 0, 128
        %582 = vxpose.xlu0.c.b16.cont [5/8] 0, 128
        %583 = vxpose.xlu0.c.b16.cont [6/8] 0, 128
        %584 = vxpose.xlu0.c.b16.cont [7/8] 0, 128
        %585 = vxpose.xlu0.c.b16.end [8/8] 0, 128
        %v586 = vpop.trf.xlu0
        %v587 = vpop.trf.xlu0
        %v588 = vpop.trf.xlu0
        %v589 = vpop.trf.xlu0
        %v590 = vpop.trf.xlu0
        %v591 = vpop.trf.xlu0
        %v592 = vpop.trf.xlu0
        %v593 = vpop.trf.xlu0
        %vm594 = vcmask 64512
        %v596 = vsel %vm594, %v570, 0
        %v599 = vsel %vm594, %v571, 0
        %v602 = vsel %vm594, %v572, 0
        %v605 = vsel %vm594, %v573, 0
        %v608 = vsel %vm594, %v574, 0
        %v611 = vsel %vm594, %v575, 0
        %v614 = vsel %vm594, %v576, 0
        %v617 = vsel %vm594, %v577, 0
        %v620 = vsel %vm594, %v586, 0
        %v623 = vsel %vm594, %v587, 0
        %v626 = vsel %vm594, %v588, 0
        %v629 = vsel %vm594, %v589, 0
        %v632 = vsel %vm594, %v590, 0
        %v635 = vsel %vm594, %v591, 0
        %v638 = vsel %vm594, %v592, 0
        %v641 = vsel %vm594, %v593, 0
        %vm643 = vcmask 1043456
        %v645 = vsel %vm643, %v554, 0
        %647 = vmatprep.subr.bf16.mxu0 0
        %648 = vmatpush1.bf16.msra.mxu0 0
        %649 = vmatprep.subr.bf16.mxu0 0
        %650 = vmatpush1.bf16.msra.mxu0 0
        %651 = vmatprep.subr.bf16.mxu0 0
        %652 = vmatpush1.bf16.msra.mxu0 0
        %653 = vmatprep.subr.bf16.mxu0 0
        %654 = vmatpush1.bf16.msra.mxu0 0
        %655 = vmatprep.subr.bf16.mxu0 0
        %656 = vmatpush1.bf16.msra.mxu0 0
        %657 = vmatprep.subr.bf16.mxu0 0
        %658 = vmatpush1.bf16.msra.mxu0 0
        %659 = vmatprep.subr.bf16.mxu0 0
        %660 = vmatpush1.bf16.msra.mxu0 0
        %661 = vmatprep.subr.bf16.mxu0 0
        %662 = vmatpush1.bf16.msra.mxu0 %v645
        %663 = vmatprep.subr.bf16.mxu0 0
        %664 = vmatpush2.bf16.msra.mxu0 0
        %665 = vmatprep.subr.bf16.mxu0 0
        %666 = vmatpush2.bf16.msra.mxu0 0
        %667 = vmatprep.subr.bf16.mxu0 0
        %668 = vmatpush2.bf16.msra.mxu0 0
        %669 = vmatprep.subr.bf16.mxu0 0
        %670 = vmatpush2.bf16.msra.mxu0 0
        %671 = vmatprep.subr.bf16.mxu0 0
        %672 = vmatpush2.bf16.msra.mxu0 0
        %673 = vmatprep.subr.bf16.mxu0 0
        %674 = vmatpush2.bf16.msra.mxu0 0
        %675 = vmatprep.subr.bf16.mxu0 0
        %676 = vmatpush2.bf16.msra.mxu0 0
        %677 = vmatprep.subr.bf16.mxu0 0
        %678 = vmatpush2.bf16.msra.mxu0 0
        %679 = vmatprep.mubr.bf16.mxu0 0
        %680 = vmatmul.mubr.bf16.gmra.mxu0 %v596
        %v681 = vpop.f32.mrf.mxu0
        %v682 = vadd.f32 0.0, %v681
        %v683 = vpop.f32.mrf.mxu0
        %v684 = vpop.f32.mrf.mxu0
        %v685 = vadd.f32 0.0, %v684
        %v686 = vpop.f32.mrf.mxu0
        %687 = vmatprep.mubr.bf16.mxu0 0
        %688 = vmatmul.mubr.bf16.gmra.mxu0 %v599
        %v689 = vpop.f32.mrf.mxu0
        %v690 = vadd.f32 0.0, %v689
        %v691 = vpop.f32.mrf.mxu0
        %v692 = vpop.f32.mrf.mxu0
        %v693 = vadd.f32 0.0, %v692
        %v694 = vpop.f32.mrf.mxu0
        %695 = vmatprep.mubr.bf16.mxu0 0
        %696 = vmatmul.mubr.bf16.gmra.mxu0 %v602
        %v697 = vpop.f32.mrf.mxu0
        %v698 = vadd.f32 0.0, %v697
        %v699 = vpop.f32.mrf.mxu0
        %v700 = vpop.f32.mrf.mxu0
        %v701 = vadd.f32 0.0, %v700
        %v702 = vpop.f32.mrf.mxu0
        %703 = vmatprep.mubr.bf16.mxu0 0
        %704 = vmatmul.mubr.bf16.gmra.mxu0 %v605
        %v705 = vpop.f32.mrf.mxu0
        %v706 = vadd.f32 0.0, %v705
        %v707 = vpop.f32.mrf.mxu0
        %v708 = vpop.f32.mrf.mxu0
        %v709 = vadd.f32 0.0, %v708
        %v710 = vpop.f32.mrf.mxu0
        %711 = vmatprep.mubr.bf16.mxu0 0
        %712 = vmatmul.mubr.bf16.gmra.mxu0 %v608
        %v713 = vpop.f32.mrf.mxu0
        %v714 = vadd.f32 0.0, %v713
        %v715 = vpop.f32.mrf.mxu0
        %v716 = vpop.f32.mrf.mxu0
        %v717 = vadd.f32 0.0, %v716
        %v718 = vpop.f32.mrf.mxu0
        %719 = vmatprep.mubr.bf16.mxu0 0
        %720 = vmatmul.mubr.bf16.gmra.mxu0 %v611
        %v721 = vpop.f32.mrf.mxu0
        %v722 = vadd.f32 0.0, %v721
        %v723 = vpop.f32.mrf.mxu0
        %v724 = vpop.f32.mrf.mxu0
        %v725 = vadd.f32 0.0, %v724
        %v726 = vpop.f32.mrf.mxu0
        %727 = vmatprep.mubr.bf16.mxu0 0
        %728 = vmatmul.mubr.bf16.gmra.mxu0 %v614
        %v729 = vpop.f32.mrf.mxu0
        %v730 = vadd.f32 0.0, %v729
        %v731 = vpop.f32.mrf.mxu0
        %v732 = vpop.f32.mrf.mxu0
        %v733 = vadd.f32 0.0, %v732
        %v734 = vpop.f32.mrf.mxu0
        %735 = vmatprep.mubr.bf16.mxu0 0
        %736 = vmatmul.mubr.bf16.gmra.mxu0 %v617
        %v737 = vpop.f32.mrf.mxu0
        %v738 = vadd.f32 0.0, %v737
        %v739 = vpop.f32.mrf.mxu0
        %v740 = vpop.f32.mrf.mxu0
        %v741 = vadd.f32 0.0, %v740
        %v742 = vpop.f32.mrf.mxu0
        %743 = vmatprep.mubr.bf16.mxu0 0
        %744 = vmatmul.mubr.bf16.gmra.mxu0 %v620
        %v745 = vpop.f32.mrf.mxu0
        %v746 = vadd.f32 0.0, %v745
        %v747 = vpop.f32.mrf.mxu0
        %v748 = vpop.f32.mrf.mxu0
        %v749 = vadd.f32 0.0, %v748
        %v750 = vpop.f32.mrf.mxu0
        %751 = vmatprep.mubr.bf16.mxu0 0
        %752 = vmatmul.mubr.bf16.gmra.mxu0 %v623
        %v753 = vpop.f32.mrf.mxu0
        %v754 = vadd.f32 0.0, %v753
        %v755 = vpop.f32.mrf.mxu0
        %v756 = vpop.f32.mrf.mxu0
        %v757 = vadd.f32 0.0, %v756
        %v758 = vpop.f32.mrf.mxu0
        %759 = vmatprep.mubr.bf16.mxu0 0
        %760 = vmatmul.mubr.bf16.gmra.mxu0 %v626
        %v761 = vpop.f32.mrf.mxu0
        %v762 = vadd.f32 0.0, %v761
        %v763 = vpop.f32.mrf.mxu0
        %v764 = vpop.f32.mrf.mxu0
        %v765 = vadd.f32 0.0, %v764
        %v766 = vpop.f32.mrf.mxu0
        %767 = vmatprep.mubr.bf16.mxu0 0
        %768 = vmatmul.mubr.bf16.gmra.mxu0 %v629
        %v769 = vpop.f32.mrf.mxu0
        %v770 = vadd.f32 0.0, %v769
        %v771 = vpop.f32.mrf.mxu0
        %v772 = vpop.f32.mrf.mxu0
        %v773 = vadd.f32 0.0, %v772
        %v774 = vpop.f32.mrf.mxu0
        %775 = vmatprep.mubr.bf16.mxu0 0
        %776 = vmatmul.mubr.bf16.gmra.mxu0 %v632
        %v777 = vpop.f32.mrf.mxu0
        %v778 = vadd.f32 0.0, %v777
        %v779 = vpop.f32.mrf.mxu0
        %v780 = vpop.f32.mrf.mxu0
        %v781 = vadd.f32 0.0, %v780
        %v782 = vpop.f32.mrf.mxu0
        %783 = vmatprep.mubr.bf16.mxu0 0
        %784 = vmatmul.mubr.bf16.gmra.mxu0 %v635
        %v785 = vpop.f32.mrf.mxu0
        %v786 = vadd.f32 0.0, %v785
        %v787 = vpop.f32.mrf.mxu0
        %v788 = vpop.f32.mrf.mxu0
        %v789 = vadd.f32 0.0, %v788
        %v790 = vpop.f32.mrf.mxu0
        %791 = vmatprep.mubr.bf16.mxu0 0
        %792 = vmatmul.mubr.bf16.gmra.mxu0 %v638
        %v793 = vpop.f32.mrf.mxu0
        %v794 = vadd.f32 0.0, %v793
        %v795 = vpop.f32.mrf.mxu0
        %v796 = vpop.f32.mrf.mxu0
        %v797 = vadd.f32 0.0, %v796
        %v798 = vpop.f32.mrf.mxu0
        %799 = vmatprep.mubr.bf16.mxu0 0
        %800 = vmatmul.mubr.bf16.gmra.mxu0 %v641
        %v801 = vpop.f32.mrf.mxu0
        %v802 = vadd.f32 0.0, %v801
        %v803 = vpop.f32.mrf.mxu0
        %v804 = vpop.f32.mrf.mxu0
        %v805 = vadd.f32 0.0, %v804
        %v806 = vpop.f32.mrf.mxu0
        %807 = vdwg.mxu0
        %v808 = vmax.f32 %v682, %v698
        %v809 = vmax.f32 %v685, %v701
        %v810 = vmax.f32 %v690, %v706
        %v811 = vmax.f32 %v693, %v709
        %v812 = vmax.f32 %v808, %v714
        %v813 = vmax.f32 %v809, %v717
        %v814 = vmax.f32 %v810, %v722
        %v815 = vmax.f32 %v811, %v725
        %v816 = vmax.f32 %v812, %v730
        %v817 = vmax.f32 %v813, %v733
        %v818 = vmax.f32 %v814, %v738
        %v819 = vmax.f32 %v815, %v741
        %v820 = vmax.f32 %v816, %v746
        %v821 = vmax.f32 %v817, %v749
        %v822 = vmax.f32 %v818, %v754
        %v823 = vmax.f32 %v819, %v757
        %v824 = vmax.f32 %v820, %v762
        %v825 = vmax.f32 %v821, %v765
        %v826 = vmax.f32 %v822, %v770
        %v827 = vmax.f32 %v823, %v773
        %v828 = vmax.f32 %v824, %v778
        %v829 = vmax.f32 %v825, %v781
        %v830 = vmax.f32 %v826, %v786
        %v831 = vmax.f32 %v827, %v789
        %v832 = vmax.f32 %v828, %v794
        %v833 = vmax.f32 %v829, %v797
        %v834 = vmax.f32 %v830, %v802
        %v835 = vmax.f32 %v831, %v805
        %v836 = vmax.f32 %v832, %v833
        %v837 = vmax.f32 %v834, %v835
        %v838 = vmax.f32 %v836, %v837
        %v839 = vrot.slane %v838, 4
        %v840 = vmax.f32 %v838, %v839
        %v841 = vrot.slane %v840, 2
        %v842 = vmax.f32 %v840, %v841
        %v843 = vrot.slane %v842, 1
        %v844 = vmax.f32 %v842, %v843
        %v845 = vsub.f32 %v682, %v844
        %v846 = vsub.f32 %v685, %v844
        %v847 = vsub.f32 %v690, %v844
        %v848 = vsub.f32 %v693, %v844
        %v849 = vsub.f32 %v698, %v844
        %v850 = vsub.f32 %v701, %v844
        %v851 = vsub.f32 %v706, %v844
        %v852 = vsub.f32 %v709, %v844
        %v853 = vsub.f32 %v714, %v844
        %v854 = vsub.f32 %v717, %v844
        %v855 = vsub.f32 %v722, %v844
        %v856 = vsub.f32 %v725, %v844
        %v857 = vsub.f32 %v730, %v844
        %v858 = vsub.f32 %v733, %v844
        %v859 = vsub.f32 %v738, %v844
        %v860 = vsub.f32 %v741, %v844
        %v861 = vsub.f32 %v746, %v844
        %v862 = vsub.f32 %v749, %v844
        %v863 = vsub.f32 %v754, %v844
        %v864 = vsub.f32 %v757, %v844
        %v865 = vsub.f32 %v762, %v844
        %v866 = vsub.f32 %v765, %v844
        %v867 = vsub.f32 %v770, %v844
        %v868 = vsub.f32 %v773, %v844
        %v869 = vsub.f32 %v778, %v844
        %v870 = vsub.f32 %v781, %v844
        %v871 = vsub.f32 %v786, %v844
        %v872 = vsub.f32 %v789, %v844
        %v873 = vsub.f32 %v794, %v844
        %v874 = vsub.f32 %v797, %v844
        %v875 = vsub.f32 %v802, %v844
        %v876 = vsub.f32 %v805, %v844
        %v877 = vmul.f32 %v845, 1.442695
        %v878 = vpow.pop %v877
        %v879 = vmul.f32 %v846, 1.442695
        %v880 = vpow.pop %v879
        %v881 = vmul.f32 %v847, 1.442695
        %v882 = vpow.pop %v881
        %v883 = vmul.f32 %v848, 1.442695
        %v884 = vpow.pop %v883
        %v885 = vmul.f32 %v849, 1.442695
        %v886 = vpow.pop %v885
        %v887 = vmul.f32 %v850, 1.442695
        %v888 = vpow.pop %v887
        %v889 = vmul.f32 %v851, 1.442695
        %v890 = vpow.pop %v889
        %v891 = vmul.f32 %v852, 1.442695
        %v892 = vpow.pop %v891
        %v893 = vmul.f32 %v853, 1.442695
        %v894 = vpow.pop %v893
        %v895 = vmul.f32 %v854, 1.442695
        %v896 = vpow.pop %v895
        %v897 = vmul.f32 %v855, 1.442695
        %v898 = vpow.pop %v897
        %v899 = vmul.f32 %v856, 1.442695
        %v900 = vpow.pop %v899
        %v901 = vmul.f32 %v857, 1.442695
        %v902 = vpow.pop %v901
        %v903 = vmul.f32 %v858, 1.442695
        %v904 = vpow.pop %v903
        %v905 = vmul.f32 %v859, 1.442695
        %v906 = vpow.pop %v905
        %v907 = vmul.f32 %v860, 1.442695
        %v908 = vpow.pop %v907
        %v909 = vmul.f32 %v861, 1.442695
        %v910 = vpow.pop %v909
        %v911 = vmul.f32 %v862, 1.442695
        %v912 = vpow.pop %v911
        %v913 = vmul.f32 %v863, 1.442695
        %v914 = vpow.pop %v913
        %v915 = vmul.f32 %v864, 1.442695
        %v916 = vpow.pop %v915
        %v917 = vmul.f32 %v865, 1.442695
        %v918 = vpow.pop %v917
        %v919 = vmul.f32 %v866, 1.442695
        %v920 = vpow.pop %v919
        %v921 = vmul.f32 %v867, 1.442695
        %v922 = vpow.pop %v921
        %v923 = vmul.f32 %v868, 1.442695
        %v924 = vpow.pop %v923
        %v925 = vmul.f32 %v869, 1.442695
        %v926 = vpow.pop %v925
        %v927 = vmul.f32 %v870, 1.442695
        %v928 = vpow.pop %v927
        %v929 = vmul.f32 %v871, 1.442695
        %v930 = vpow.pop %v929
        %v931 = vmul.f32 %v872, 1.442695
        %v932 = vpow.pop %v931
        %v933 = vmul.f32 %v873, 1.442695
        %v934 = vpow.pop %v933
        %v935 = vmul.f32 %v874, 1.442695
        %v936 = vpow.pop %v935
        %v937 = vmul.f32 %v875, 1.442695
        %v938 = vpow.pop %v937
        %v939 = vmul.f32 %v876, 1.442695
        %v940 = vpow.pop %v939
        %v941 = vld [vmem:[#allocation3] sm:$0xff]
        %v942 = vld [vmem:[#allocation3 + $0x8] sm:$0xff]
        %v943 = vld [vmem:[#allocation3 + $0x10] sm:$0xff]
        %v944 = vld [vmem:[#allocation3 + $0x18] sm:$0xff]
        %v945 = vld [vmem:[#allocation3 + $0x20] sm:$0x11]
        %v946 = vpack.c.bf16 %v880, %v878
        %v947 = vpack.c.bf16 %v884, %v882
        %v948 = vpack.c.bf16 %v888, %v886
        %v949 = vpack.c.bf16 %v892, %v890
        %v950 = vpack.c.bf16 %v896, %v894
        %v951 = vpack.c.bf16 %v900, %v898
        %v952 = vpack.c.bf16 %v904, %v902
        %v953 = vpack.c.bf16 %v908, %v906
        %v954 = vpack.c.bf16 %v912, %v910
        %v955 = vpack.c.bf16 %v916, %v914
        %v956 = vpack.c.bf16 %v920, %v918
        %v957 = vpack.c.bf16 %v924, %v922
        %v958 = vpack.c.bf16 %v928, %v926
        %v959 = vpack.c.bf16 %v932, %v930
        %v960 = vpack.c.bf16 %v936, %v934
        %v961 = vpack.c.bf16 %v940, %v938
        %v967 = vunpack.c.l.b16 %v941
        %v968 = vunpack.c.h.b16 %v941
        %v969 = vunpack.c.l.b16 %v942
        %v970 = vunpack.c.h.b16 %v942
        %v971 = vunpack.c.l.b16 %v943
        %v972 = vunpack.c.h.b16 %v943
        %v973 = vunpack.c.l.b16 %v944
        %v974 = vunpack.c.h.b16 %v944
        %v975 = vunpack.c.l.b16 %v945
        %v976 = vunpack.c.h.b16 %v945
        %v977 = vpack.c.b16 %v969, %v967
        %v978 = vpack.c.b16 %v970, %v968
        %v979 = vpack.c.b16 %v973, %v971
        %v980 = vpack.c.b16 %v974, %v972
        %v981 = vpack.c.b16 %v975, %v975
        %v982 = vpack.c.b16 %v976, %v976
        %989 = vmatprep.subr.bf16.mxu0 0
        %990 = vmatpush1.bf16.msra.mxu0 %v953
        %991 = vmatprep.subr.bf16.mxu0 0
        %992 = vmatpush1.bf16.msra.mxu0 %v952
        %993 = vmatprep.subr.bf16.mxu0 0
        %994 = vmatpush1.bf16.msra.mxu0 %v951
        %995 = vmatprep.subr.bf16.mxu0 0
        %996 = vmatpush1.bf16.msra.mxu0 %v950
        %997 = vmatprep.subr.bf16.mxu0 0
        %998 = vmatpush1.bf16.msra.mxu0 %v949
        %999 = vmatprep.subr.bf16.mxu0 0
        %1000 = vmatpush1.bf16.msra.mxu0 %v948
        %1001 = vmatprep.subr.bf16.mxu0 0
        %1002 = vmatpush1.bf16.msra.mxu0 %v947
        %1003 = vmatprep.subr.bf16.mxu0 0
        %1004 = vmatpush1.bf16.msra.mxu0 %v946
        %1005 = vmatprep.subr.bf16.mxu0 0
        %1006 = vmatpush2.bf16.msra.mxu0 %v961
        %1007 = vmatprep.subr.bf16.mxu0 0
        %1008 = vmatpush2.bf16.msra.mxu0 %v960
        %1009 = vmatprep.subr.bf16.mxu0 0
        %1010 = vmatpush2.bf16.msra.mxu0 %v959
        %1011 = vmatprep.subr.bf16.mxu0 0
        %1012 = vmatpush2.bf16.msra.mxu0 %v958
        %1013 = vmatprep.subr.bf16.mxu0 0
        %1014 = vmatpush2.bf16.msra.mxu0 %v957
        %1015 = vmatprep.subr.bf16.mxu0 0
        %1016 = vmatpush2.bf16.msra.mxu0 %v956
        %1017 = vmatprep.subr.bf16.mxu0 0
        %1018 = vmatpush2.bf16.msra.mxu0 %v955
        %1019 = vmatprep.subr.bf16.mxu0 0
        %1020 = vmatpush2.bf16.msra.mxu0 %v954
        %1021 = vmatprep.mubr.bf16.mxu0 %v978
        %1022 = vmatmul.mubr.bf16.gmra.mxu0 %v977
        %v1023 = vpop.f32.mrf.mxu0
        %v1024 = vadd.f32 0.0, %v1023
        %v1025 = vpop.f32.mrf.mxu0
        %v1026 = vpop.f32.mrf.mxu0
        %v1027 = vadd.f32 0.0, %v1026
        %v1028 = vpop.f32.mrf.mxu0
        %1029 = vmatprep.mubr.bf16.mxu0 %v980
        %1030 = vmatmul.mubr.bf16.gmra.mxu0 %v979
        %v1031 = vpop.f32.mrf.mxu0
        %v1032 = vadd.f32 0.0, %v1031
        %v1033 = vpop.f32.mrf.mxu0
        %v1034 = vpop.f32.mrf.mxu0
        %v1035 = vadd.f32 0.0, %v1034
        %v1036 = vpop.f32.mrf.mxu0
        %1037 = vmatprep.mubr.bf16.mxu0 %v982
        %1038 = vmatmul.mubr.bf16.gmra.mxu0 %v981
        %v1039 = vpop.f32.mrf.mxu0
        %v1040 = vadd.f32 0.0, %v1039
        %v1041 = vpop.f32.mrf.mxu0
        %v1042 = vpop.f32.mrf.mxu0
        %v1043 = vpop.f32.mrf.mxu0
        %1044 = vdwg.mxu0
        %v1045 = vrcp.pop %v1040
        %v1046 = vlaneseq
        %v1047 = vshrl.u32 %v1046, 7
        %v1048 = vsub.s32 0, %v1047
        %v1049 = vrot.slane %v1045, %v1048
        %v1050 = vmul.f32 %v1024, %v1049
        %v1051 = vmul.f32 %v1027, %v1049
        %v1052 = vmul.f32 %v1032, %v1049
        %v1053 = vmul.f32 %v1035, %v1049
        %v1054 = vadd.f32 %v1050, %v502
        %v1055 = vadd.f32 %v1051, %v503
        %v1056 = vadd.f32 %v1052, %v504
        %v1057 = vadd.f32 %v1053, %v505
        %1058 = vst [vmem:[%s299] sm:$0xff] %v1054
        %1059 = vst [vmem:[%s299 + $0x8] sm:$0xff] %v1055
        %1060 = vst [vmem:[%s299 + $0x10] sm:$0xff] %v1056
        %1061 = vst [vmem:[%s299 + $0x18] sm:$0xff] %v1057
        %s1062 = sand.u32 %s164, 1
        %s1063 = scalar_lea.sflag [#allocation6], %s1062
        %s1064 = sand.u32 %s164, 1
        %s1065 = smul.addr %s1064, 32
        %s1066 = scalar_lea.vmem [#allocation9], %s1065
        // Predicated region
        $region53: #{tpu_custom_call.1} parent=39 // pred_check
          %p1067 = pneg %p174
        $region54: #{tpu_custom_call.1} parent=39 // pred_check_branch
          %1069 = sbr.rel (%p1067) target = $region56
        $region55: #{tpu_custom_call.1} parent=39 // pred_region
          %s1071 = ssub.s32 512, 512
          %1072 = vsyncadd %s1063, %s1071
          %s1073 = smul.addr %s29, 8
          %s1074 = sadd.s32 %s30, %s1073
          %s1075 = smul.addr %s1074, 128
          %s1076 = scalar_lea.hbm %s5, %s1075
          %s1077 = sshll.u32 %s1066, 4
          %s1078 = int_to_ptr.vmem [resolvable:$true] %s1077
          %1083 = dma.vmem_to_hbm [thread:$0]  %s1078, 512, %s1076, %s1063, 128, 256, 8
        $region56: #{tpu_custom_call.1} parent=39 // pred_fallthru
          _
      $region40: #{tpu_custom_call.1} parent=5 // pred_fallthru
        _
      %p1084 = scmp.le.s32.totalorder 2, %s20
      // Predicated region
      $region57: #{tpu_custom_call.1} parent=5 // pred_check
        %p1085 = pneg %p1084
      $region58: #{tpu_custom_call.1} parent=5 // pred_check_branch
        %1087 = sbr.rel (%p1085) target = $region60
      $region59: #{tpu_custom_call.1} parent=5 // pred_region
        %s1088 = ssub.s32 %s20, 2
        // Predicated region
        $region61: #{tpu_custom_call.1} parent=59 // pred_check
          %p1089 = pneg %p180
        $region62: #{tpu_custom_call.1} parent=59 // pred_check_branch
          %1091 = sbr.rel (%p1089) target = $region64
        $region63: #{tpu_custom_call.1} parent=59 // pred_region
          %s1092 = sand.u32 %s165, 1
          %s1093 = scalar_lea.sflag [#allocation6], %s1092
          %s1094 = sand.u32 %s165, 1
          %s1095 = smul.addr %s1094, 32
          %s1096 = scalar_lea.vmem [#allocation9], %s1095
          %1097 = dma.done %s1093, 512
        $region64: #{tpu_custom_call.1} parent=59 // pred_fallthru
          _
      $region60: #{tpu_custom_call.1} parent=5 // pred_fallthru
        _
    $region6: #{tpu_custom_call.1} parent=1 // loop_footer
      %s24 = sadd.s32 1, %s20
    $region7: #{tpu_custom_call.1} parent=1 // loop_footer_branch
      %19 = sbr.rel target = $region3
    $region8: #{tpu_custom_call.1} parent=1 // loop_exit
      _
    %1098 = vsyncpa [#allocation5], 1
    %s1099 = scalar_lea.sflag [#allocation5], 1
    %1100 = vsyncpa %s1099, 1
    %1101 = vsyncpa [#allocation8], 1
    %s1102 = scalar_lea.sflag [#allocation8], 1
    %1103 = vsyncpa %s1102, 1
    %1104 = vsyncpa [#allocation6], 1
    %s1105 = scalar_lea.sflag [#allocation6], 1
    %1106 = vsyncpa %s1105, 1

</llo_original>
